<compile_context>
chip_gen: v5e
topology: v5e:2x2
jax: 0.10.0
libtpu: 0.0.40
codegen_flags: <defaults>
</compile_context>

<pallas_src>
import functools

import jax
import jax.numpy as jnp
from jax.experimental import pallas as pl
from jax.experimental.pallas import tpu as pltpu


def _linear_act_kernel(x_ref, w_ref, b_ref, o_ref, *, apply_relu):
    """Single feature block: whole D reduced in one step (no scratch).

    x_ref: (TB, 128, D) VMEM    w_ref: (1, 1, D) f32 VMEM
    b_ref: (1, 1) f32 SMEM      o_ref: (TB, 128) VMEM (lane-dense)
    """
    acc = jnp.sum(x_ref[...].astype(jnp.float32) * w_ref[...], axis=-1)  # (TB,128)
    y = acc + b_ref[0, 0]
    if apply_relu:
        y = jnp.maximum(y, 0.0)
    o_ref[...] = y.astype(o_ref.dtype)


def _linear_act_kernel_ksplit(x_ref, w_ref, b_ref, o_ref, acc_ref, *, apply_relu):
    """Large-D path: feature (reduction) axis is the last grid axis.

    acc_ref: (TB, 128) f32 VMEM scratch (lane-dense, no x128 padding).
    """
    k = pl.program_id(1)

    @pl.when(k == 0)
    def _init():
        acc_ref[...] = jnp.zeros_like(acc_ref)

    acc_ref[...] += jnp.sum(x_ref[...].astype(jnp.float32) * w_ref[...], axis=-1)

    @pl.when(k == pl.num_programs(1) - 1)
    def _finalize():
        y = acc_ref[...] + b_ref[0, 0]
        if apply_relu:
            y = jnp.maximum(y, 0.0)
        o_ref[...] = y.astype(o_ref.dtype)


def _pick_feature_tile(D, itemsize, target_bytes):
    """Full D unless even a minimal 8-row-block (1024 rows) slab of x would
    overshoot the target; then a 128-aligned divisor of D (K grid axis)."""
    if 1024 * D * itemsize <= target_bytes or D % 128 != 0:
        # TODO(synk): very large D that is not a multiple of 128 falls back to a
        # full-D block; pad the feature dim if that ever exceeds the VMEM limit.
        return D
    tk = max(128, (target_bytes // (1024 * itemsize)) // 128 * 128)
    while D % tk:
        tk -= 128
    return tk


def _pick_row_tile(R, tile_k, itemsize, target_bytes):
    """TB = number of 128-row blocks per grid step.  Must divide R and be a
    multiple of 8 (sublane rule for the (TB, 128) out block) unless TB == R.
    Keeps >= 4 row steps when R allows so v7x's two TensorCores each get >= 2
    pipelined steps on the 'parallel' row axis."""
    if R <= 8:
        return R
    blk_bytes = 128 * tile_k * itemsize
    tb = max(8, min(R, target_bytes // blk_bytes))
    tb = min(tb, max(8, R // 4))          # keep >= 4 row steps when possible
    tb = (tb // 8) * 8
    while tb > 8 and R % tb:
        tb -= 8
    if R % tb:
        return R                          # only hit if R wasn't 8-aligned
    return tb


def linear_with_activation(x, weight, bias, *, act="relu",
                           target_block_bytes=8 << 20,
                           vmem_limit_bytes=48 * 1024 * 1024):
    """y = activation(x @ weight.T + bias).squeeze()  (nn.Linear(D, 1) + ReLU).

    x: (..., D); weight: (1, D); bias: (1,).  Output dtype follows x.
    target_block_bytes=8 MiB fits v7x's 64 MiB-per-TensorCore VMEM; on v6e
    (128 MiB VMEM) 16 MiB is a good setting.
    """
    D = x.shape[-1]
    assert weight.shape == (1, D) and bias.shape == (1,)
    apply_relu = (act == "relu")
    lead_shape = x.shape[:-1]

    x2 = x.reshape(-1, D)
    M = x2.shape[0]
    itemsize = x2.dtype.itemsize

    # Row padding: view rows as (R, 128) blocks; if we will tile over R (R > 8)
    # force R to a multiple of 8 so row tiles satisfy the sublane rule.  The pad
    # copy only happens for ragged batch sizes.
    R = (M + 127) // 128
    if R > 8 and R % 8:
        R = ((R + 7) // 8) * 8
    M_pad = R * 128
    if M_pad != M:
        x2 = jnp.pad(x2, ((0, M_pad - M), (0, 0)))
    x3 = x2.reshape(R, 128, D)                           # contiguous split: free

    w3 = weight.reshape(1, 1, D).astype(jnp.float32)     # tiny, lane-dense row
    b_smem = bias.reshape(1, 1).astype(jnp.float32)      # scalar bias in SMEM

    tile_k = _pick_feature_tile(D, itemsize, target_block_bytes)
    tb = _pick_row_tile(R, tile_k, itemsize, target_block_bytes)
    k_steps = D // tile_k

    if k_steps == 1:
        kernel = functools.partial(_linear_act_kernel, apply_relu=apply_relu)
        grid = (R // tb,)
        in_specs = [
            pl.BlockSpec((tb, 128, D), lambda i: (i, 0, 0)),          # x stream
            pl.BlockSpec((1, 1, D), lambda i: (0, 0, 0)),             # weight row
            pl.BlockSpec(memory_space=pltpu.MemorySpace.SMEM),        # bias scalar
        ]
        out_specs = pl.BlockSpec((tb, 128), lambda i: (i, 0))
        scratch_shapes = []
        dim_sem = ("parallel",)
    else:
        kernel = functools.partial(_linear_act_kernel_ksplit, apply_relu=apply_relu)
        grid = (R // tb, k_steps)                       # reduction axis last
        in_specs = [
            pl.BlockSpec((tb, 128, tile_k), lambda i, k: (i, 0, k)),
            pl.BlockSpec((1, 1, tile_k), lambda i, k: (0, 0, k)),
            pl.BlockSpec(memory_space=pltpu.MemorySpace.SMEM),
        ]
        out_specs = pl.BlockSpec((tb, 128), lambda i, k: (i, 0))
        scratch_shapes = [pltpu.VMEM((tb, 128), jnp.float32)]
        dim_sem = ("parallel", "arbitrary")

    out = pl.pallas_call(
        kernel,
        out_shape=jax.ShapeDtypeStruct((R, 128), x2.dtype),
        grid_spec=pltpu.PrefetchScalarGridSpec(
            num_scalar_prefetch=0,
            grid=grid,
            in_specs=in_specs,
            out_specs=out_specs,
            scratch_shapes=scratch_shapes,
        ),
        compiler_params=pltpu.CompilerParams(
            dimension_semantics=dim_sem,
            vmem_limit_bytes=vmem_limit_bytes,
        ),
    )(x3, w3, b_smem)

    y = out.reshape(-1)[:M].reshape(lead_shape)
    # torch's .squeeze(): the fc output dim is already folded away; also drop
    # any remaining size-1 dims (M == 1 -> 0-d scalar, matching torch).
    return jnp.squeeze(y)


if __name__ == "__main__":
    key = jax.random.PRNGKey(0)
    kx1, kx2, kx3, kx4, kw, kb = jax.random.split(key, 6)

    def make_params(input_dim):
        bound = 1.0 / (input_dim ** 0.5)
        w = jax.random.uniform(kw, (1, input_dim), jnp.float32, -bound, bound)
        b = jax.random.uniform(kb, (1,), jnp.float32, -bound, bound)
        return w, b

    def reference(x, w, b):
        return jnp.squeeze(jnp.maximum(x @ w.T + b, 0.0))

    cases = [
        # 1) single row-step grid
        (jax.random.normal(kx1, (256, 128), jnp.float32), {}),
        # 2) tiny shape from the module test (row-padding path)
        (jax.random.normal(kx2, (8, 32), jnp.float32), {}),
        # 3) ragged batch -> row pad + multi-step 'parallel' row grid
        (jax.random.normal(kx3, (2000, 128), jnp.float32), {}),
        # 4) small block target to exercise the K-split (reduction-axis) kernel
        (jax.random.normal(kx4, (128, 512), jnp.float32),
         dict(target_block_bytes=128 * 1024)),
    ]

    for x, kwargs in cases:
        w, b = make_params(x.shape[-1])
        y = jax.block_until_ready(linear_with_activation(x, w, b, **kwargs))
        y_ref = reference(x, w, b)
        assert y.shape == y_ref.shape, (y.shape, y_ref.shape)
        assert jnp.allclose(y, y_ref, atol=1e-4, rtol=1e-4)

    print("KERNEL_OK")
</pallas_src>

<mosaic_0001>
module attributes {stable_mosaic.version = 11 : i64} {
  func.func @_linear_act_kernel(%arg0: i32, %arg1: memref<2x128x128xf32, #tpu.memory_space<vmem>>, %arg2: memref<1x1x128xf32, #tpu.memory_space<vmem>>, %arg3: memref<1x1xf32, #tpu.memory_space<smem>>, %arg4: memref<2x128xf32, #tpu.memory_space<vmem>>) attributes {dimension_semantics = [#tpu.dimension_semantics<parallel>], iteration_bounds = array<i64: 1>, scalar_prefetch = 0 : i64, scratch_operands = 0 : i64, tpu.core_type = #tpu.core_type<tc>, window_params = [{transform_indices = @transform_0, window_bounds = array<i64: 2, 128, 128>}, {pipeline_mode = #tpu.pipeline_mode<synchronous>, transform_indices = @transform_1, window_bounds = array<i64: 1, 1, 128>}, {transform_indices = @transform_2, window_bounds = array<i64: 1, 1>}, {transform_indices = @transform_3, window_bounds = array<i64: 2, 128>}]} {
    %c0 = arith.constant 0 : index
    %c0_0 = arith.constant 0 : index
    %c0_1 = arith.constant 0 : index
    %0 = vector.load %arg1[%c0, %c0_0, %c0_1] : memref<2x128x128xf32, #tpu.memory_space<vmem>>, vector<2x128x128xf32>
    %c0_2 = arith.constant 0 : index
    %c0_3 = arith.constant 0 : index
    %c0_4 = arith.constant 0 : index
    %1 = vector.load %arg2[%c0_2, %c0_3, %c0_4] : memref<1x1x128xf32, #tpu.memory_space<vmem>>, vector<1x1x128xf32>
    %2 = vector.broadcast %1 : vector<1x1x128xf32> to vector<2x128x128xf32>
    %3 = arith.mulf %0, %2 : vector<2x128x128xf32>
    %cst = arith.constant dense<0.000000e+00> : vector<2x128xf32>
    %4 = vector.multi_reduction <add>, %3, %cst [2] : vector<2x128x128xf32> to vector<2x128xf32>
    %c0_5 = arith.constant 0 : index
    %c0_6 = arith.constant 0 : index
    %5 = memref.load %arg3[%c0_5, %c0_6] : memref<1x1xf32, #tpu.memory_space<smem>>
    %6 = vector.broadcast %5 : f32 to vector<2x128xf32>
    %7 = arith.addf %4, %6 : vector<2x128xf32>
    %cst_7 = arith.constant 0.000000e+00 : f32
    %8 = vector.broadcast %cst_7 : f32 to vector<2x128xf32>
    %9 = arith.maximumf %7, %8 : vector<2x128xf32>
    %c0_8 = arith.constant 0 : index
    %c0_9 = arith.constant 0 : index
    %10 = vector.load %arg4[%c0_8, %c0_9] : memref<2x128xf32, #tpu.memory_space<vmem>>, vector<2x128xf32>
    tpu.vector_store %arg4[%c0_8, %c0_9], %9 {strides = array<i32>} : memref<2x128xf32, #tpu.memory_space<vmem>>, vector<2x128xf32>,
    return
  }
  func.func @transform_0(%arg0: i32) -> (i32, i32, i32) {
    %c0_i32 = arith.constant 0 : i32
    %c0_i32_0 = arith.constant 0 : i32
    %c0_i32_1 = arith.constant 0 : i32
    return %arg0, %c0_i32, %c0_i32_0 : i32, i32, i32
  }
  func.func @transform_1(%arg0: i32) -> (i32, i32, i32) {
    %c0_i32 = arith.constant 0 : i32
    %c0_i32_0 = arith.constant 0 : i32
    %c0_i32_1 = arith.constant 0 : i32
    %c0_i32_2 = arith.constant 0 : i32
    return %c0_i32, %c0_i32_0, %c0_i32_1 : i32, i32, i32
  }
  func.func @transform_2(%arg0: i32) -> (i32, i32) {
    %c0_i32 = arith.constant 0 : i32
    %c0_i32_0 = arith.constant 0 : i32
    %c0_i32_1 = arith.constant 0 : i32
    return %c0_i32, %c0_i32_0 : i32, i32
  }
  func.func @transform_3(%arg0: i32) -> (i32, i32) {
    %c0_i32 = arith.constant 0 : i32
    %c0_i32_0 = arith.constant 0 : i32
    return %arg0, %c0_i32 : i32, i32
  }
}

</mosaic_0001>

<llo_original>
// kernel: tpu_custom_call.1
$region0: #{tpu_custom_call.1}
  #allocation0 [shape = 'u32[]', space=smem, size = 0x4, offset = 0x4, fixed_abs, tag = 'smem constant byte address 0x4 - core index']
  #allocation1 [shape = 'u32[72,128]{1,0:T(1,128)}', space=vmem, size = 0x9000, scoped, tag = 'internal scratch']
  #allocation2 [shape = 'f32[1,1]{1,0:T(1,128)S(6)}', space=smem, size = 0x200, scoped, tag = 'scoped memory for tpu_custom_call.1']
  %s0 = inlined_call_operand.hbm [shape: f32[2,128,128], index: 0, kind: input, shape index: {}]
  %s1 = inlined_call_operand.vmem [shape: f32[1,1,128], index: 1, kind: input, shape index: {}]
  %s2 = inlined_call_operand.<no memory space> [shape: f32[1,1], index: 2, kind: input, shape index: {}]
  %s3 = inlined_call_operand.hbm [shape: f32[2,128], index: 3, kind: output, shape index: {}]
  %s4 = sld [smem:[#allocation0]]
  $region26: #{tpu_custom_call.1} parent=0
    _
  %s6 = ssub.s32 1, %s4
  %s7 = scalar_select 0, %s6, %s4
  %8 = sst [smem:[#allocation2]] %s2
  $region1: #{tpu_custom_call.1} parent=0
    #allocation3 [shape = 'u8[131072]{0}', space=vmem, size = 0x20000, scoped, tag = 'input window, operand 0, single buffered']
    #allocation4 [shape = 's32[1]{0}', space=sflag, size = 0x4, scoped, tag = 'scoped memory for tpu_custom_call.1']
    #allocation5 [shape = 's32[1]{0}', space=sflag, size = 0x4, scoped, tag = 'scoped memory for tpu_custom_call.1']
    #allocation6 [shape = 'u8[1024]{0}', space=vmem, size = 0x400, scoped, tag = 'output window, operand 0, single buffered']
    %9 = vsyncpa [#allocation4], 0
    %10 = vsyncpa [#allocation5], 0
    // Predicated region
    $region2: #{tpu_custom_call.1} parent=1 // pred_check
      _
    $region3: #{tpu_custom_call.1} parent=1 // pred_check_branch
      %12 = sbr.rel (0) target = $region5
    $region4: #{tpu_custom_call.1} parent=1 // pred_region
      %14 = vsyncadd [#allocation4], 0
      %s15 = sshll.u32 %s0, 4
      %s16 = int_to_ptr.hbm [resolvable:$true] %s15
      %s17 = sshll.u32 [#allocation3], 4
      %s18 = int_to_ptr.vmem [resolvable:$true] %s17
      %23 = dma.hbm_to_vmem [thread:$0]  %s16, 4096, %s18, [#allocation4], 128, 128, 8
    $region5: #{tpu_custom_call.1} parent=1 // pred_fallthru
      _
    // Predicated region
    $region6: #{tpu_custom_call.1} parent=1 // pred_check
      _
    $region7: #{tpu_custom_call.1} parent=1 // pred_check_branch
      %25 = sbr.rel (0) target = $region9
    $region8: #{tpu_custom_call.1} parent=1 // pred_region
      _
    $region9: #{tpu_custom_call.1} parent=1 // pred_fallthru
      _
    // Predicated region
    $region10: #{tpu_custom_call.1} parent=1 // pred_check
      _
    $region11: #{tpu_custom_call.1} parent=1 // pred_check_branch
      %27 = sbr.rel (0) target = $region13
    $region12: #{tpu_custom_call.1} parent=1 // pred_region
      _
    $region13: #{tpu_custom_call.1} parent=1 // pred_fallthru
      _
    // Predicated region
    $region14: #{tpu_custom_call.1} parent=1 // pred_check
      _
    $region15: #{tpu_custom_call.1} parent=1 // pred_check_branch
      %29 = sbr.rel (0) target = $region17
    $region16: #{tpu_custom_call.1} parent=1 // pred_region
      %31 = dma.done [#allocation4], 4096
    $region17: #{tpu_custom_call.1} parent=1 // pred_fallthru
      _
    %v32 = vld [vmem:[#allocation3] sm:$0xff]
    %v33 = vld [vmem:[#allocation3 + $0x8] sm:$0xff]
    %v34 = vld [vmem:[#allocation3 + $0x10] sm:$0xff]
    %v35 = vld [vmem:[#allocation3 + $0x18] sm:$0xff]
    %v36 = vld [vmem:[#allocation3 + $0x20] sm:$0xff]
    %v37 = vld [vmem:[#allocation3 + $0x28] sm:$0xff]
    %v38 = vld [vmem:[#allocation3 + $0x30] sm:$0xff]
    %v39 = vld [vmem:[#allocation3 + $0x38] sm:$0xff]
    %v40 = vld [vmem:[#allocation3 + $0x40] sm:$0xff]
    %v41 = vld [vmem:[#allocation3 + $0x48] sm:$0xff]
    %v42 = vld [vmem:[#allocation3 + $0x50] sm:$0xff]
    %v43 = vld [vmem:[#allocation3 + $0x58] sm:$0xff]
    %v44 = vld [vmem:[#allocation3 + $0x60] sm:$0xff]
    %v45 = vld [vmem:[#allocation3 + $0x68] sm:$0xff]
    %v46 = vld [vmem:[#allocation3 + $0x70] sm:$0xff]
    %v47 = vld [vmem:[#allocation3 + $0x78] sm:$0xff]
    %v48 = vld [vmem:[#allocation3 + $0x80] sm:$0xff]
    %v49 = vld [vmem:[#allocation3 + $0x88] sm:$0xff]
    %v50 = vld [vmem:[#allocation3 + $0x90] sm:$0xff]
    %v51 = vld [vmem:[#allocation3 + $0x98] sm:$0xff]
    %v52 = vld [vmem:[#allocation3 + $0xa0] sm:$0xff]
    %v53 = vld [vmem:[#allocation3 + $0xa8] sm:$0xff]
    %v54 = vld [vmem:[#allocation3 + $0xb0] sm:$0xff]
    %v55 = vld [vmem:[#allocation3 + $0xb8] sm:$0xff]
    %v56 = vld [vmem:[#allocation3 + $0xc0] sm:$0xff]
    %v57 = vld [vmem:[#allocation3 + $0xc8] sm:$0xff]
    %v58 = vld [vmem:[#allocation3 + $0xd0] sm:$0xff]
    %v59 = vld [vmem:[#allocation3 + $0xd8] sm:$0xff]
    %v60 = vld [vmem:[#allocation3 + $0xe0] sm:$0xff]
    %v61 = vld [vmem:[#allocation3 + $0xe8] sm:$0xff]
    %v62 = vld [vmem:[#allocation3 + $0xf0] sm:$0xff]
    %v63 = vld [vmem:[#allocation3 + $0xf8] sm:$0xff]
    %v64 = vld [vmem:[%s1] sm:$0x1]
    %v66 = vperm.slane %v64, 0
    %v68 = vmul.f32 %v32, %v66
    %v69 = vmul.f32 %v33, %v66
    %v70 = vmul.f32 %v34, %v66
    %v71 = vmul.f32 %v35, %v66
    %v72 = vmul.f32 %v36, %v66
    %v73 = vmul.f32 %v37, %v66
    %v74 = vmul.f32 %v38, %v66
    %v75 = vmul.f32 %v39, %v66
    %v76 = vmul.f32 %v40, %v66
    %v77 = vmul.f32 %v41, %v66
    %v78 = vmul.f32 %v42, %v66
    %v79 = vmul.f32 %v43, %v66
    %v80 = vmul.f32 %v44, %v66
    %v81 = vmul.f32 %v45, %v66
    %v82 = vmul.f32 %v46, %v66
    %v83 = vmul.f32 %v47, %v66
    %v84 = vmul.f32 %v48, %v66
    %v85 = vmul.f32 %v49, %v66
    %v86 = vmul.f32 %v50, %v66
    %v87 = vmul.f32 %v51, %v66
    %v88 = vmul.f32 %v52, %v66
    %v89 = vmul.f32 %v53, %v66
    %v90 = vmul.f32 %v54, %v66
    %v91 = vmul.f32 %v55, %v66
    %v92 = vmul.f32 %v56, %v66
    %v93 = vmul.f32 %v57, %v66
    %v94 = vmul.f32 %v58, %v66
    %v95 = vmul.f32 %v59, %v66
    %v96 = vmul.f32 %v60, %v66
    %v97 = vmul.f32 %v61, %v66
    %v98 = vmul.f32 %v62, %v66
    %v99 = vmul.f32 %v63, %v66
    %100 = vadd.xlane.f32.xlu0 %v68
    %v101 = vpop.xlane.xlu0 %100
    %102 = vadd.xlane.f32.xlu0 %v69
    %v103 = vpop.xlane.xlu0 %102
    %104 = vadd.xlane.f32.xlu0 %v70
    %v105 = vpop.xlane.xlu0 %104
    %106 = vadd.xlane.f32.xlu0 %v71
    %v107 = vpop.xlane.xlu0 %106
    %108 = vadd.xlane.f32.xlu0 %v72
    %v109 = vpop.xlane.xlu0 %108
    %110 = vadd.xlane.f32.xlu0 %v73
    %v111 = vpop.xlane.xlu0 %110
    %112 = vadd.xlane.f32.xlu0 %v74
    %v113 = vpop.xlane.xlu0 %112
    %114 = vadd.xlane.f32.xlu0 %v75
    %v115 = vpop.xlane.xlu0 %114
    %116 = vadd.xlane.f32.xlu0 %v76
    %v117 = vpop.xlane.xlu0 %116
    %118 = vadd.xlane.f32.xlu0 %v77
    %v119 = vpop.xlane.xlu0 %118
    %120 = vadd.xlane.f32.xlu0 %v78
    %v121 = vpop.xlane.xlu0 %120
    %122 = vadd.xlane.f32.xlu0 %v79
    %v123 = vpop.xlane.xlu0 %122
    %124 = vadd.xlane.f32.xlu0 %v80
    %v125 = vpop.xlane.xlu0 %124
    %126 = vadd.xlane.f32.xlu0 %v81
    %v127 = vpop.xlane.xlu0 %126
    %128 = vadd.xlane.f32.xlu0 %v82
    %v129 = vpop.xlane.xlu0 %128
    %130 = vadd.xlane.f32.xlu0 %v83
    %v131 = vpop.xlane.xlu0 %130
    %132 = vadd.xlane.f32.xlu0 %v84
    %v133 = vpop.xlane.xlu0 %132
    %134 = vadd.xlane.f32.xlu0 %v85
    %v135 = vpop.xlane.xlu0 %134
    %136 = vadd.xlane.f32.xlu0 %v86
    %v137 = vpop.xlane.xlu0 %136
    %138 = vadd.xlane.f32.xlu0 %v87
    %v139 = vpop.xlane.xlu0 %138
    %140 = vadd.xlane.f32.xlu0 %v88
    %v141 = vpop.xlane.xlu0 %140
    %142 = vadd.xlane.f32.xlu0 %v89
    %v143 = vpop.xlane.xlu0 %142
    %144 = vadd.xlane.f32.xlu0 %v90
    %v145 = vpop.xlane.xlu0 %144
    %146 = vadd.xlane.f32.xlu0 %v91
    %v147 = vpop.xlane.xlu0 %146
    %148 = vadd.xlane.f32.xlu0 %v92
    %v149 = vpop.xlane.xlu0 %148
    %150 = vadd.xlane.f32.xlu0 %v93
    %v151 = vpop.xlane.xlu0 %150
    %152 = vadd.xlane.f32.xlu0 %v94
    %v153 = vpop.xlane.xlu0 %152
    %154 = vadd.xlane.f32.xlu0 %v95
    %v155 = vpop.xlane.xlu0 %154
    %156 = vadd.xlane.f32.xlu0 %v96
    %v157 = vpop.xlane.xlu0 %156
    %158 = vadd.xlane.f32.xlu0 %v97
    %v159 = vpop.xlane.xlu0 %158
    %160 = vadd.xlane.f32.xlu0 %v98
    %v161 = vpop.xlane.xlu0 %160
    %162 = vadd.xlane.f32.xlu0 %v99
    %v163 = vpop.xlane.xlu0 %162
    %s164 = sld [smem:[#allocation2]]
    %v165 = vstv %s164
    %v166 = vadd.f32 %v101, %v165
    %v167 = vadd.f32 %v103, %v165
    %v168 = vadd.f32 %v105, %v165
    %v169 = vadd.f32 %v107, %v165
    %v170 = vadd.f32 %v109, %v165
    %v171 = vadd.f32 %v111, %v165
    %v172 = vadd.f32 %v113, %v165
    %v173 = vadd.f32 %v115, %v165
    %v174 = vadd.f32 %v117, %v165
    %v175 = vadd.f32 %v119, %v165
    %v176 = vadd.f32 %v121, %v165
    %v177 = vadd.f32 %v123, %v165
    %v178 = vadd.f32 %v125, %v165
    %v179 = vadd.f32 %v127, %v165
    %v180 = vadd.f32 %v129, %v165
    %v181 = vadd.f32 %v131, %v165
    %v182 = vadd.f32 %v133, %v165
    %v183 = vadd.f32 %v135, %v165
    %v184 = vadd.f32 %v137, %v165
    %v185 = vadd.f32 %v139, %v165
    %v186 = vadd.f32 %v141, %v165
    %v187 = vadd.f32 %v143, %v165
    %v188 = vadd.f32 %v145, %v165
    %v189 = vadd.f32 %v147, %v165
    %v190 = vadd.f32 %v149, %v165
    %v191 = vadd.f32 %v151, %v165
    %v192 = vadd.f32 %v153, %v165
    %v193 = vadd.f32 %v155, %v165
    %v194 = vadd.f32 %v157, %v165
    %v195 = vadd.f32 %v159, %v165
    %v196 = vadd.f32 %v161, %v165
    %v197 = vadd.f32 %v163, %v165
    %v198 = vmax.f32 %v166, 0.0
    %v199 = vmax.f32 %v167, 0.0
    %v200 = vmax.f32 %v168, 0.0
    %v201 = vmax.f32 %v169, 0.0
    %v202 = vmax.f32 %v170, 0.0
    %v203 = vmax.f32 %v171, 0.0
    %v204 = vmax.f32 %v172, 0.0
    %v205 = vmax.f32 %v173, 0.0
    %v206 = vmax.f32 %v174, 0.0
    %v207 = vmax.f32 %v175, 0.0
    %v208 = vmax.f32 %v176, 0.0
    %v209 = vmax.f32 %v177, 0.0
    %v210 = vmax.f32 %v178, 0.0
    %v211 = vmax.f32 %v179, 0.0
    %v212 = vmax.f32 %v180, 0.0
    %v213 = vmax.f32 %v181, 0.0
    %v214 = vmax.f32 %v182, 0.0
    %v215 = vmax.f32 %v183, 0.0
    %v216 = vmax.f32 %v184, 0.0
    %v217 = vmax.f32 %v185, 0.0
    %v218 = vmax.f32 %v186, 0.0
    %v219 = vmax.f32 %v187, 0.0
    %v220 = vmax.f32 %v188, 0.0
    %v221 = vmax.f32 %v189, 0.0
    %v222 = vmax.f32 %v190, 0.0
    %v223 = vmax.f32 %v191, 0.0
    %v224 = vmax.f32 %v192, 0.0
    %v225 = vmax.f32 %v193, 0.0
    %v226 = vmax.f32 %v194, 0.0
    %v227 = vmax.f32 %v195, 0.0
    %v228 = vmax.f32 %v196, 0.0
    %v229 = vmax.f32 %v197, 0.0
    %v262 = vlaneseq
    %v263 = vand.u32 %v262, 127
    %v264 = vperm.slane %v198, %v263
    %v265 = vadd.s32 %v263, 4294967288
    %v266 = vperm.slane %v199, %v265
    %vm267 = vcmask 130112
    %v268 = vsel %vm267, %v266, %v264
    %v269 = vadd.s32 %v263, 4294967280
    %v270 = vperm.slane %v200, %v269
    %vm271 = vcmask 195712
    %v272 = vsel %vm271, %v270, %v268
    %v273 = vadd.s32 %v263, 4294967272
    %v274 = vperm.slane %v201, %v273
    %vm275 = vcmask 261312
    %v276 = vsel %vm275, %v274, %v272
    %v277 = vadd.s32 %v263, 4294967264
    %v278 = vperm.slane %v202, %v277
    %vm279 = vcmask 326912
    %v280 = vsel %vm279, %v278, %v276
    %v281 = vadd.s32 %v263, 4294967256
    %v282 = vperm.slane %v203, %v281
    %vm283 = vcmask 392512
    %v284 = vsel %vm283, %v282, %v280
    %v285 = vadd.s32 %v263, 4294967248
    %v286 = vperm.slane %v204, %v285
    %vm287 = vcmask 458112
    %v288 = vsel %vm287, %v286, %v284
    %v289 = vadd.s32 %v263, 4294967240
    %v290 = vperm.slane %v205, %v289
    %vm291 = vcmask 523712
    %v292 = vsel %vm291, %v290, %v288
    %v293 = vadd.s32 %v263, 4294967232
    %v294 = vperm.slane %v206, %v293
    %vm295 = vcmask 589312
    %v296 = vsel %vm295, %v294, %v292
    %v297 = vadd.s32 %v263, 4294967224
    %v298 = vperm.slane %v207, %v297
    %vm299 = vcmask 654912
    %v300 = vsel %vm299, %v298, %v296
    %v301 = vadd.s32 %v263, 4294967216
    %v302 = vperm.slane %v208, %v301
    %vm303 = vcmask 720512
    %v304 = vsel %vm303, %v302, %v300
    %v305 = vadd.s32 %v263, 4294967208
    %v306 = vperm.slane %v209, %v305
    %vm307 = vcmask 786112
    %v308 = vsel %vm307, %v306, %v304
    %v309 = vadd.s32 %v263, 4294967200
    %v310 = vperm.slane %v210, %v309
    %vm311 = vcmask 851712
    %v312 = vsel %vm311, %v310, %v308
    %v313 = vadd.s32 %v263, 4294967192
    %v314 = vperm.slane %v211, %v313
    %vm315 = vcmask 917312
    %v316 = vsel %vm315, %v314, %v312
    %v317 = vadd.s32 %v263, 4294967184
    %v318 = vperm.slane %v212, %v317
    %vm319 = vcmask 982912
    %v320 = vsel %vm319, %v318, %v316
    %v321 = vadd.s32 %v263, 4294967176
    %v322 = vperm.slane %v213, %v321
    %vm323 = vcmask 1048512
    %v324 = vsel %vm323, %v322, %v320
    %v325 = vperm.slane %v214, %v263
    %v326 = vperm.slane %v215, %v265
    %v327 = vsel %vm267, %v326, %v325
    %v328 = vperm.slane %v216, %v269
    %v329 = vsel %vm271, %v328, %v327
    %v330 = vperm.slane %v217, %v273
    %v331 = vsel %vm275, %v330, %v329
    %v332 = vperm.slane %v218, %v277
    %v333 = vsel %vm279, %v332, %v331
    %v334 = vperm.slane %v219, %v281
    %v335 = vsel %vm283, %v334, %v333
    %v336 = vperm.slane %v220, %v285
    %v337 = vsel %vm287, %v336, %v335
    %v338 = vperm.slane %v221, %v289
    %v339 = vsel %vm291, %v338, %v337
    %v340 = vperm.slane %v222, %v293
    %v341 = vsel %vm295, %v340, %v339
    %v342 = vperm.slane %v223, %v297
    %v343 = vsel %vm299, %v342, %v341
    %v344 = vperm.slane %v224, %v301
    %v345 = vsel %vm303, %v344, %v343
    %v346 = vperm.slane %v225, %v305
    %v347 = vsel %vm307, %v346, %v345
    %v348 = vperm.slane %v226, %v309
    %v349 = vsel %vm311, %v348, %v347
    %v350 = vperm.slane %v227, %v313
    %v351 = vsel %vm315, %v350, %v349
    %v352 = vperm.slane %v228, %v317
    %v353 = vsel %vm319, %v352, %v351
    %v354 = vperm.slane %v229, %v321
    %v355 = vsel %vm323, %v354, %v353
    %vm356 = vcmask 1041409
    %v357 = vsel %vm356, %v355, %v324
    %359 = vst [vmem:[#allocation6] sm:$0x3] %v357
    // Predicated region
    $region18: #{tpu_custom_call.1} parent=1 // pred_check
      _
    $region19: #{tpu_custom_call.1} parent=1 // pred_check_branch
      %361 = sbr.rel (0) target = $region21
    $region20: #{tpu_custom_call.1} parent=1 // pred_region
      %363 = vsyncadd [#allocation5], 0
      %s365 = sshll.u32 [#allocation6], 4
      %s366 = int_to_ptr.vmem [resolvable:$true] %s365
      %s367 = sshll.u32 %s3, 4
      %s368 = int_to_ptr.hbm [resolvable:$true] %s367
      %370 = dma.vmem_to_hbm [thread:$0]  %s366, 32, %s368, [#allocation5]
    $region21: #{tpu_custom_call.1} parent=1 // pred_fallthru
      _
    // Predicated region
    $region22: #{tpu_custom_call.1} parent=1 // pred_check
      _
    $region23: #{tpu_custom_call.1} parent=1 // pred_check_branch
      %372 = sbr.rel (0) target = $region25
    $region24: #{tpu_custom_call.1} parent=1 // pred_region
      %374 = dma.done [#allocation5], 32
    $region25: #{tpu_custom_call.1} parent=1 // pred_fallthru
      _
    %375 = vsyncpa [#allocation4], 1
    %376 = vsyncpa [#allocation5], 1

</llo_original>
